<compile_context>
chip_gen: v7x
topology: tpu7x:2x2x1
jax: 0.10.0
libtpu: 0.0.40
codegen_flags: <defaults>
</compile_context>

<pallas_src>
import jax
import jax.numpy as jnp
from jax import lax
from jax.experimental import pallas as pl
from jax.experimental.pallas import tpu as pltpu

GEO_CH = 8
LANES = 128
ACC_ROWS = 8            # accumulator height = one f32 sublane tile
MAX_TILE_ROWS = 1024    # ~10 MiB f32 per grid step, ~20 MiB double-buffered


def _round_up(x, m):
    return ((x + m - 1) // m) * m


def _plan_tiles(num_rows, row_splits):
    """Pick (tile_rows, inner_tiles) for one row split.

    tile_rows is a multiple of ACC_ROWS, never exceeds the array's row extent
    (blocks may overhang at the boundary but never start out of bounds), and is
    balanced across the inner tiles so there is no tiny-tile / divisibility
    cliff (e.g. 400x400 -> R=1250 -> 2 tiles of 632 rows, not 157 tiles of 8).
    """
    rows_per_split = pl.cdiv(num_rows, row_splits)
    row_floor = (num_rows // ACC_ROWS) * ACC_ROWS   # >= ACC_ROWS (wrapper pads tiny maps)
    inner = pl.cdiv(rows_per_split, MAX_TILE_ROWS)
    tile = row_floor
    for _ in range(4):                              # converges in <= 2 passes
        tile = min(_round_up(pl.cdiv(rows_per_split, inner), ACC_ROWS), row_floor)
        new_inner = pl.cdiv(rows_per_split, tile)
        if new_inner == inner:
            break
        inner = new_inner
    inner = pl.cdiv(rows_per_split, tile)
    return tile, inner


def _make_kernel(tile_rows, num_inner, total_rows, needs_mask):
    folds = tile_rows // ACC_ROWS

    def fold(x):
        """(tile_rows, 128) -> (ACC_ROWS, 128) in-register partial reduction."""
        if folds == 1:
            return x
        return jnp.sum(x.reshape(folds, ACC_ROWS, LANES), axis=0)

    def kernel(fs_ref, ls_ref, lm_ref, fg_ref, lg_ref, out_ref):
        # out_ref: (4, ACC_ROWS, LANES) per-(batch, split) accumulator, resident
        # across the inner row-tile (reduction) grid axis.
        t = pl.program_id(2)

        @pl.when(t == 0)
        def _():
            out_ref[...] = jnp.zeros_like(out_ref)

        f32 = jnp.float32
        fs = fs_ref[...].astype(f32)   # (T, 128)  predicted score
        ls = ls_ref[...].astype(f32)   # (T, 128)  label score
        lm = lm_ref[...].astype(f32)   # (T, 128)  training mask

        if needs_mask:
            # Rows at/after `total_rows` belong to the partial boundary block
            # (Pallas pads the DMA; those values are undefined), so select them
            # to 0 before anything reaches an accumulator.  jnp.where is a pure
            # select, so garbage/NaN in masked rows cannot propagate.
            offset = (pl.program_id(1) * num_inner + t) * tile_rows
            row_id = lax.broadcasted_iota(jnp.int32, (tile_rows, LANES), 0)
            keep = row_id < (total_rows - offset)
            gate = lambda x: jnp.where(keep, x, 0.0)
        else:
            gate = lambda x: x

        # --- dice partial sums -------------------------------------------
        ls_lm = ls * lm
        out_ref[0] += fold(gate(fs * ls_lm))   # intersection
        out_ref[1] += fold(gate(fs * lm))      # pred * mask
        out_ref[2] += fold(gate(ls_lm))        # gt * mask

        # --- smooth-L1 geo loss, unrolled over the 8 channels -------------
        # Only (T,128) temporaries are live; no (8,T,128) slab is materialized.
        in_sum = jnp.zeros((tile_rows, LANES), f32)
        for c in range(GEO_CH):
            d = jnp.abs(lg_ref[c].astype(f32) - fg_ref[c].astype(f32))
            in_sum = in_sum + jnp.where(d < ls, d * d, d - 0.5)
        weight = lg_ref[GEO_CH].astype(f32) * (1.0 / GEO_CH)   # l_geo[:, 8] / 8
        # l_score appears twice (out_loss * l_score, then the mean) exactly as
        # in the reference implementation.
        out_ref[3] += fold(gate(in_sum * (weight * ls * ls)))

    return kernel


def east_loss(f_score, f_geo, l_score, l_geo, l_mask, eps=1e-6):
    """f_score/l_score/l_mask: (N,1,H,W); f_geo: (N,8,H,W); l_geo: (N,9,H,W)."""
    N, _, H, W = f_score.shape
    hw = H * W

    # ---- flatten spatial axes into rows of 128 lanes (no transpose) ------
    min_hw = ACC_ROWS * LANES
    if hw % LANES != 0 or hw < min_hw:
        # TODO(synk): lane-misaligned (or tiny) feature maps still take one XLA
        # pad copy; the common 128-aligned case below is a pure metadata reshape.
        hw_pad = max(_round_up(hw, LANES), min_hw)
    else:
        hw_pad = hw
    pad = hw_pad - hw
    num_rows = hw_pad // LANES            # >= ACC_ROWS

    def prep(x):
        c = x.shape[1]
        x = x.reshape(N, c, hw)
        if pad:
            x = jnp.pad(x, ((0, 0), (0, 0), (0, pad)))
        x = x.reshape(N, c, num_rows, LANES)
        return x[:, 0] if c == 1 else x   # squeeze the channel dim for c == 1

    fs = prep(f_score)   # (N, R, 128)
    ls = prep(l_score)
    lm = prep(l_mask)
    fg = prep(f_geo)     # (N, 8, R, 128)
    lg = prep(l_geo)     # (N, 9, R, 128)

    # ---- tiling plan ------------------------------------------------------
    row_splits = 2 if N == 1 else 1       # keep both v7x TensorCores busy at N==1
    tile_rows, num_inner = _plan_tiles(num_rows, row_splits)
    if row_splits > 1 and (row_splits * num_inner - 1) * tile_rows >= num_rows:
        row_splits = 1                     # degenerate split: fall back to one split
        tile_rows, num_inner = _plan_tiles(num_rows, row_splits)
    needs_mask = (row_splits * num_inner * tile_rows) != num_rows

    def row_block(n, s, t):
        return n, s * num_inner + t, 0

    score_spec = pl.BlockSpec((None, tile_rows, LANES), row_block)

    def geo_spec(c):
        return pl.BlockSpec((None, c, tile_rows, LANES),
                            lambda n, s, t: (n, 0, s * num_inner + t, 0))

    in_bytes = sum(int(a.size) * a.dtype.itemsize for a in (fs, ls, lm, fg, lg))
    out_bytes = N * row_splits * 4 * ACC_ROWS * LANES * 4
    cost = pl.CostEstimate(flops=70 * N * hw_pad, transcendentals=0,
                           bytes_accessed=in_bytes + out_bytes)

    partials = pl.pallas_call(
        _make_kernel(tile_rows, num_inner, num_rows, needs_mask),
        out_shape=jax.ShapeDtypeStruct((N, row_splits, 4, ACC_ROWS, LANES),
                                       jnp.float32),
        grid_spec=pltpu.PrefetchScalarGridSpec(
            num_scalar_prefetch=0,
            grid=(N, row_splits, num_inner),
            in_specs=[score_spec, score_spec, score_spec,
                      geo_spec(GEO_CH), geo_spec(GEO_CH + 1)],
            out_specs=pl.BlockSpec((None, None, 4, ACC_ROWS, LANES),
                                   lambda n, s, t: (n, s, 0, 0, 0)),
        ),
        compiler_params=pltpu.CompilerParams(
            dimension_semantics=("parallel", "parallel", "arbitrary"),
            vmem_limit_bytes=40 * 1024 * 1024,
        ),
        cost_estimate=cost,
    )(fs, ls, lm, fg, lg)

    intersection = jnp.sum(partials[:, :, 0])
    union = jnp.sum(partials[:, :, 1]) + jnp.sum(partials[:, :, 2]) + eps
    dice = 1.0 - 2.0 * intersection / union
    smooth_l1_loss = jnp.sum(partials[:, :, 3]) / (N * hw)   # mean over original size
    dice_loss = dice * 0.01
    return {"loss": dice_loss + smooth_l1_loss,
            "dice_loss": dice_loss,
            "smooth_l1_loss": smooth_l1_loss}


def _east_loss_ref(f_score, f_geo, l_score, l_geo, l_mask, eps=1e-6):
    """Pure-JAX reference mirroring the PaddleOCR / PyTorch EASTLoss."""
    f_score = f_score.astype(jnp.float32)
    f_geo = f_geo.astype(jnp.float32)
    l_score = l_score.astype(jnp.float32)
    l_geo = l_geo.astype(jnp.float32)
    l_mask = l_mask.astype(jnp.float32)
    inter = jnp.sum(f_score * l_score * l_mask)
    union = jnp.sum(f_score * l_mask) + jnp.sum(l_score * l_mask) + eps
    dice = 1.0 - 2.0 * inter / union
    smooth_l1 = jnp.zeros_like(l_score)
    for i in range(GEO_CH):
        d = l_geo[:, i:i + 1] - f_geo[:, i:i + 1]
        a = jnp.abs(d)
        sign = (a < l_score).astype(jnp.float32)
        in_loss = a * a * sign + (a - 0.5) * (1.0 - sign)
        smooth_l1 = smooth_l1 + l_geo[:, GEO_CH:GEO_CH + 1] / GEO_CH * in_loss * l_score
    sl1 = jnp.mean(smooth_l1 * l_score)
    d01 = dice * 0.01
    return {"loss": d01 + sl1, "dice_loss": d01, "smooth_l1_loss": sl1}


def _make_inputs(key, N, H, W, dtype=jnp.float32):
    k1, k2, k3, k4, k5 = jax.random.split(key, 5)
    f_score = jax.nn.sigmoid(jax.random.normal(k1, (N, 1, H, W), jnp.float32))
    f_geo = jax.random.normal(k2, (N, GEO_CH, H, W), jnp.float32)
    l_score = (jax.random.uniform(k3, (N, 1, H, W)) > 0.5).astype(jnp.float32)
    l_geo = jax.random.normal(k4, (N, GEO_CH + 1, H, W), jnp.float32)
    l_mask = (jax.random.uniform(k5, (N, 1, H, W)) > 0.2).astype(jnp.float32)
    return tuple(a.astype(dtype) for a in (f_score, f_geo, l_score, l_geo, l_mask))


if __name__ == "__main__":
    key = jax.random.PRNGKey(0)
    east_loss_jit = jax.jit(east_loss)

    cases = [
        # (N, H, W, dtype)
        (2, 32, 32, jnp.float32),   # exact single tile, no mask, no pad
        (2, 32, 52, jnp.float32),   # hw%128==0 but R=13: copy-free ragged rows, masked tail
        (2, 24, 20, jnp.float32),   # lane-misaligned tiny map -> (rare) small pad path
        (1, 48, 64, jnp.float32),   # N==1 -> 2-way row split (both TCs on v7x) + mask
        (2, 64, 64, jnp.bfloat16),  # bf16 inputs pass straight through (half HBM bytes)
    ]
    for case, (N, H, W, dtype) in enumerate(cases):
        key, sub = jax.random.split(key)
        args = _make_inputs(sub, N, H, W, dtype)
        out = east_loss_jit(*args)
        out = jax.tree_util.tree_map(jax.block_until_ready, out)
        ref = _east_loss_ref(*args)
        tol = dict(rtol=1e-4, atol=1e-5) if dtype == jnp.bfloat16 else dict(rtol=1e-5, atol=1e-6)
        for name in ("loss", "dice_loss", "smooth_l1_loss"):
            assert jnp.allclose(out[name], ref[name], **tol), (
                case, name, out[name], ref[name])

    print("KERNEL_OK")
</pallas_src>

<mosaic_0001>
module attributes {stable_mosaic.version = 11 : i64} {
  func.func @kernel(%arg0: i32, %arg1: i32, %arg2: i32, %arg3: memref<1x8x128xf32, #tpu.memory_space<vmem>>, %arg4: memref<1x8x128xf32, #tpu.memory_space<vmem>>, %arg5: memref<1x8x128xf32, #tpu.memory_space<vmem>>, %arg6: memref<1x8x8x128xf32, #tpu.memory_space<vmem>>, %arg7: memref<1x9x8x128xf32, #tpu.memory_space<vmem>>, %arg8: memref<1x1x4x8x128xf32, #tpu.memory_space<vmem>>) attributes {dimension_semantics = [#tpu.dimension_semantics<parallel>, #tpu.dimension_semantics<parallel>, #tpu.dimension_semantics<arbitrary>], iteration_bounds = array<i64: 2, 1, 1>, scalar_prefetch = 0 : i64, scratch_operands = 0 : i64, tpu.core_type = #tpu.core_type<tc>, window_params = [{transform_indices = @transform_0, window_bounds = array<i64: 1, 8, 128>}, {transform_indices = @transform_1, window_bounds = array<i64: 1, 8, 128>}, {transform_indices = @transform_2, window_bounds = array<i64: 1, 8, 128>}, {transform_indices = @transform_3, window_bounds = array<i64: 1, 8, 8, 128>}, {transform_indices = @transform_4, window_bounds = array<i64: 1, 9, 8, 128>}, {transform_indices = @transform_5, window_bounds = array<i64: 1, 1, 4, 8, 128>}]} {
    %c0_i32 = arith.constant 0 : i32
    %0 = arith.cmpi eq, %arg2, %c0_i32 : i32
    %1 = arith.extui %0 : i1 to i32
    %c0_i32_0 = arith.constant 0 : i32
    %2 = arith.cmpi ne, %1, %c0_i32_0 : i32
    scf.if %2 {
      %cst_118 = arith.constant 0.000000e+00 : f32
      %140 = vector.broadcast %cst_118 : f32 to vector<4x8x128xf32>
      %c0_119 = arith.constant 0 : index
      %c0_120 = arith.constant 0 : index
      %c0_121 = arith.constant 0 : index
      %c0_122 = arith.constant 0 : index
      %c0_123 = arith.constant 0 : index
      %141 = vector.load %arg8[%c0_119, %c0_120, %c0_121, %c0_122, %c0_123] : memref<1x1x4x8x128xf32, #tpu.memory_space<vmem>>, vector<1x1x4x8x128xf32>
      %142 = vector.shape_cast %141 : vector<1x1x4x8x128xf32> to vector<4x8x128xf32>
      %143 = vector.shape_cast %140 : vector<4x8x128xf32> to vector<1x1x4x8x128xf32>
      tpu.vector_store %arg8[%c0_119, %c0_120, %c0_121, %c0_122, %c0_123], %143 {strides = array<i32>} : memref<1x1x4x8x128xf32, #tpu.memory_space<vmem>>, vector<1x1x4x8x128xf32>,
    } else {
    }
    %c0 = arith.constant 0 : index
    %c0_1 = arith.constant 0 : index
    %c0_2 = arith.constant 0 : index
    %3 = vector.load %arg3[%c0, %c0_1, %c0_2] : memref<1x8x128xf32, #tpu.memory_space<vmem>>, vector<1x8x128xf32>
    %4 = vector.shape_cast %3 : vector<1x8x128xf32> to vector<8x128xf32>
    %c0_3 = arith.constant 0 : index
    %c0_4 = arith.constant 0 : index
    %c0_5 = arith.constant 0 : index
    %5 = vector.load %arg4[%c0_3, %c0_4, %c0_5] : memref<1x8x128xf32, #tpu.memory_space<vmem>>, vector<1x8x128xf32>
    %6 = vector.shape_cast %5 : vector<1x8x128xf32> to vector<8x128xf32>
    %c0_6 = arith.constant 0 : index
    %c0_7 = arith.constant 0 : index
    %c0_8 = arith.constant 0 : index
    %7 = vector.load %arg5[%c0_6, %c0_7, %c0_8] : memref<1x8x128xf32, #tpu.memory_space<vmem>>, vector<1x8x128xf32>
    %8 = vector.shape_cast %7 : vector<1x8x128xf32> to vector<8x128xf32>
    %9 = arith.mulf %6, %8 : vector<8x128xf32>
    %c0_9 = arith.constant 0 : index
    %c0_10 = arith.constant 0 : index
    %c0_11 = arith.constant 0 : index
    %c0_12 = arith.constant 0 : index
    %c0_13 = arith.constant 0 : index
    %10 = vector.load %arg8[%c0_9, %c0_10, %c0_11, %c0_12, %c0_13] : memref<1x1x4x8x128xf32, #tpu.memory_space<vmem>>, vector<1x1x1x8x128xf32>
    %11 = vector.shape_cast %10 : vector<1x1x1x8x128xf32> to vector<8x128xf32>
    %12 = arith.mulf %4, %9 : vector<8x128xf32>
    %13 = arith.addf %11, %12 : vector<8x128xf32>
    %c0_14 = arith.constant 0 : index
    %c0_15 = arith.constant 0 : index
    %c0_16 = arith.constant 0 : index
    %c0_17 = arith.constant 0 : index
    %c0_18 = arith.constant 0 : index
    %14 = vector.load %arg8[%c0_14, %c0_15, %c0_16, %c0_17, %c0_18] : memref<1x1x4x8x128xf32, #tpu.memory_space<vmem>>, vector<1x1x1x8x128xf32>
    %15 = vector.shape_cast %14 : vector<1x1x1x8x128xf32> to vector<8x128xf32>
    %16 = vector.shape_cast %13 : vector<8x128xf32> to vector<1x1x1x8x128xf32>
    tpu.vector_store %arg8[%c0_14, %c0_15, %c0_16, %c0_17, %c0_18], %16 {strides = array<i32>} : memref<1x1x4x8x128xf32, #tpu.memory_space<vmem>>, vector<1x1x1x8x128xf32>,
    %c0_19 = arith.constant 0 : index
    %c0_20 = arith.constant 0 : index
    %c1 = arith.constant 1 : index
    %c0_21 = arith.constant 0 : index
    %c0_22 = arith.constant 0 : index
    %17 = vector.load %arg8[%c0_19, %c0_20, %c1, %c0_21, %c0_22] : memref<1x1x4x8x128xf32, #tpu.memory_space<vmem>>, vector<1x1x1x8x128xf32>
    %18 = vector.shape_cast %17 : vector<1x1x1x8x128xf32> to vector<8x128xf32>
    %19 = arith.mulf %4, %8 : vector<8x128xf32>
    %20 = arith.addf %18, %19 : vector<8x128xf32>
    %c0_23 = arith.constant 0 : index
    %c0_24 = arith.constant 0 : index
    %c1_25 = arith.constant 1 : index
    %c0_26 = arith.constant 0 : index
    %c0_27 = arith.constant 0 : index
    %21 = vector.load %arg8[%c0_23, %c0_24, %c1_25, %c0_26, %c0_27] : memref<1x1x4x8x128xf32, #tpu.memory_space<vmem>>, vector<1x1x1x8x128xf32>
    %22 = vector.shape_cast %21 : vector<1x1x1x8x128xf32> to vector<8x128xf32>
    %23 = vector.shape_cast %20 : vector<8x128xf32> to vector<1x1x1x8x128xf32>
    tpu.vector_store %arg8[%c0_23, %c0_24, %c1_25, %c0_26, %c0_27], %23 {strides = array<i32>} : memref<1x1x4x8x128xf32, #tpu.memory_space<vmem>>, vector<1x1x1x8x128xf32>,
    %c0_28 = arith.constant 0 : index
    %c0_29 = arith.constant 0 : index
    %c2 = arith.constant 2 : index
    %c0_30 = arith.constant 0 : index
    %c0_31 = arith.constant 0 : index
    %24 = vector.load %arg8[%c0_28, %c0_29, %c2, %c0_30, %c0_31] : memref<1x1x4x8x128xf32, #tpu.memory_space<vmem>>, vector<1x1x1x8x128xf32>
    %25 = vector.shape_cast %24 : vector<1x1x1x8x128xf32> to vector<8x128xf32>
    %26 = arith.addf %25, %9 : vector<8x128xf32>
    %c0_32 = arith.constant 0 : index
    %c0_33 = arith.constant 0 : index
    %c2_34 = arith.constant 2 : index
    %c0_35 = arith.constant 0 : index
    %c0_36 = arith.constant 0 : index
    %27 = vector.load %arg8[%c0_32, %c0_33, %c2_34, %c0_35, %c0_36] : memref<1x1x4x8x128xf32, #tpu.memory_space<vmem>>, vector<1x1x1x8x128xf32>
    %28 = vector.shape_cast %27 : vector<1x1x1x8x128xf32> to vector<8x128xf32>
    %29 = vector.shape_cast %26 : vector<8x128xf32> to vector<1x1x1x8x128xf32>
    tpu.vector_store %arg8[%c0_32, %c0_33, %c2_34, %c0_35, %c0_36], %29 {strides = array<i32>} : memref<1x1x4x8x128xf32, #tpu.memory_space<vmem>>, vector<1x1x1x8x128xf32>,
    %cst = arith.constant 0.000000e+00 : f32
    %30 = vector.broadcast %cst : f32 to vector<8x128xf32>
    %c0_37 = arith.constant 0 : index
    %c0_38 = arith.constant 0 : index
    %c0_39 = arith.constant 0 : index
    %c0_40 = arith.constant 0 : index
    %31 = vector.load %arg7[%c0_37, %c0_38, %c0_39, %c0_40] : memref<1x9x8x128xf32, #tpu.memory_space<vmem>>, vector<1x1x8x128xf32>
    %32 = vector.shape_cast %31 : vector<1x1x8x128xf32> to vector<8x128xf32>
    %c0_41 = arith.constant 0 : index
    %c0_42 = arith.constant 0 : index
    %c0_43 = arith.constant 0 : index
    %c0_44 = arith.constant 0 : index
    %33 = vector.load %arg6[%c0_41, %c0_42, %c0_43, %c0_44] : memref<1x8x8x128xf32, #tpu.memory_space<vmem>>, vector<1x1x8x128xf32>
    %34 = vector.shape_cast %33 : vector<1x1x8x128xf32> to vector<8x128xf32>
    %35 = arith.subf %32, %34 : vector<8x128xf32>
    %36 = math.absf %35 : vector<8x128xf32>
    %37 = arith.cmpf olt, %36, %6 : vector<8x128xf32>
    %38 = arith.mulf %36, %36 : vector<8x128xf32>
    %cst_45 = arith.constant 5.000000e-01 : f32
    %39 = vector.broadcast %cst_45 : f32 to vector<8x128xf32>
    %40 = arith.subf %36, %39 : vector<8x128xf32>
    %41 = arith.select %37, %38, %40 : vector<8x128xi1>, vector<8x128xf32>
    %42 = arith.addf %30, %41 : vector<8x128xf32>
    %c0_46 = arith.constant 0 : index
    %c1_47 = arith.constant 1 : index
    %c0_48 = arith.constant 0 : index
    %c0_49 = arith.constant 0 : index
    %43 = vector.load %arg7[%c0_46, %c1_47, %c0_48, %c0_49] : memref<1x9x8x128xf32, #tpu.memory_space<vmem>>, vector<1x1x8x128xf32>
    %44 = vector.shape_cast %43 : vector<1x1x8x128xf32> to vector<8x128xf32>
    %c0_50 = arith.constant 0 : index
    %c1_51 = arith.constant 1 : index
    %c0_52 = arith.constant 0 : index
    %c0_53 = arith.constant 0 : index
    %45 = vector.load %arg6[%c0_50, %c1_51, %c0_52, %c0_53] : memref<1x8x8x128xf32, #tpu.memory_space<vmem>>, vector<1x1x8x128xf32>
    %46 = vector.shape_cast %45 : vector<1x1x8x128xf32> to vector<8x128xf32>
    %47 = arith.subf %44, %46 : vector<8x128xf32>
    %48 = math.absf %47 : vector<8x128xf32>
    %49 = arith.cmpf olt, %48, %6 : vector<8x128xf32>
    %50 = arith.mulf %48, %48 : vector<8x128xf32>
    %cst_54 = arith.constant 5.000000e-01 : f32
    %51 = vector.broadcast %cst_54 : f32 to vector<8x128xf32>
    %52 = arith.subf %48, %51 : vector<8x128xf32>
    %53 = arith.select %49, %50, %52 : vector<8x128xi1>, vector<8x128xf32>
    %54 = arith.addf %42, %53 : vector<8x128xf32>
    %c0_55 = arith.constant 0 : index
    %c2_56 = arith.constant 2 : index
    %c0_57 = arith.constant 0 : index
    %c0_58 = arith.constant 0 : index
    %55 = vector.load %arg7[%c0_55, %c2_56, %c0_57, %c0_58] : memref<1x9x8x128xf32, #tpu.memory_space<vmem>>, vector<1x1x8x128xf32>
    %56 = vector.shape_cast %55 : vector<1x1x8x128xf32> to vector<8x128xf32>
    %c0_59 = arith.constant 0 : index
    %c2_60 = arith.constant 2 : index
    %c0_61 = arith.constant 0 : index
    %c0_62 = arith.constant 0 : index
    %57 = vector.load %arg6[%c0_59, %c2_60, %c0_61, %c0_62] : memref<1x8x8x128xf32, #tpu.memory_space<vmem>>, vector<1x1x8x128xf32>
    %58 = vector.shape_cast %57 : vector<1x1x8x128xf32> to vector<8x128xf32>
    %59 = arith.subf %56, %58 : vector<8x128xf32>
    %60 = math.absf %59 : vector<8x128xf32>
    %61 = arith.cmpf olt, %60, %6 : vector<8x128xf32>
    %62 = arith.mulf %60, %60 : vector<8x128xf32>
    %cst_63 = arith.constant 5.000000e-01 : f32
    %63 = vector.broadcast %cst_63 : f32 to vector<8x128xf32>
    %64 = arith.subf %60, %63 : vector<8x128xf32>
    %65 = arith.select %61, %62, %64 : vector<8x128xi1>, vector<8x128xf32>
    %66 = arith.addf %54, %65 : vector<8x128xf32>
    %c0_64 = arith.constant 0 : index
    %c3 = arith.constant 3 : index
    %c0_65 = arith.constant 0 : index
    %c0_66 = arith.constant 0 : index
    %67 = vector.load %arg7[%c0_64, %c3, %c0_65, %c0_66] : memref<1x9x8x128xf32, #tpu.memory_space<vmem>>, vector<1x1x8x128xf32>
    %68 = vector.shape_cast %67 : vector<1x1x8x128xf32> to vector<8x128xf32>
    %c0_67 = arith.constant 0 : index
    %c3_68 = arith.constant 3 : index
    %c0_69 = arith.constant 0 : index
    %c0_70 = arith.constant 0 : index
    %69 = vector.load %arg6[%c0_67, %c3_68, %c0_69, %c0_70] : memref<1x8x8x128xf32, #tpu.memory_space<vmem>>, vector<1x1x8x128xf32>
    %70 = vector.shape_cast %69 : vector<1x1x8x128xf32> to vector<8x128xf32>
    %71 = arith.subf %68, %70 : vector<8x128xf32>
    %72 = math.absf %71 : vector<8x128xf32>
    %73 = arith.cmpf olt, %72, %6 : vector<8x128xf32>
    %74 = arith.mulf %72, %72 : vector<8x128xf32>
    %cst_71 = arith.constant 5.000000e-01 : f32
    %75 = vector.broadcast %cst_71 : f32 to vector<8x128xf32>
    %76 = arith.subf %72, %75 : vector<8x128xf32>
    %77 = arith.select %73, %74, %76 : vector<8x128xi1>, vector<8x128xf32>
    %78 = arith.addf %66, %77 : vector<8x128xf32>
    %c0_72 = arith.constant 0 : index
    %c4 = arith.constant 4 : index
    %c0_73 = arith.constant 0 : index
    %c0_74 = arith.constant 0 : index
    %79 = vector.load %arg7[%c0_72, %c4, %c0_73, %c0_74] : memref<1x9x8x128xf32, #tpu.memory_space<vmem>>, vector<1x1x8x128xf32>
    %80 = vector.shape_cast %79 : vector<1x1x8x128xf32> to vector<8x128xf32>
    %c0_75 = arith.constant 0 : index
    %c4_76 = arith.constant 4 : index
    %c0_77 = arith.constant 0 : index
    %c0_78 = arith.constant 0 : index
    %81 = vector.load %arg6[%c0_75, %c4_76, %c0_77, %c0_78] : memref<1x8x8x128xf32, #tpu.memory_space<vmem>>, vector<1x1x8x128xf32>
    %82 = vector.shape_cast %81 : vector<1x1x8x128xf32> to vector<8x128xf32>
    %83 = arith.subf %80, %82 : vector<8x128xf32>
    %84 = math.absf %83 : vector<8x128xf32>
    %85 = arith.cmpf olt, %84, %6 : vector<8x128xf32>
    %86 = arith.mulf %84, %84 : vector<8x128xf32>
    %cst_79 = arith.constant 5.000000e-01 : f32
    %87 = vector.broadcast %cst_79 : f32 to vector<8x128xf32>
    %88 = arith.subf %84, %87 : vector<8x128xf32>
    %89 = arith.select %85, %86, %88 : vector<8x128xi1>, vector<8x128xf32>
    %90 = arith.addf %78, %89 : vector<8x128xf32>
    %c0_80 = arith.constant 0 : index
    %c5 = arith.constant 5 : index
    %c0_81 = arith.constant 0 : index
    %c0_82 = arith.constant 0 : index
    %91 = vector.load %arg7[%c0_80, %c5, %c0_81, %c0_82] : memref<1x9x8x128xf32, #tpu.memory_space<vmem>>, vector<1x1x8x128xf32>
    %92 = vector.shape_cast %91 : vector<1x1x8x128xf32> to vector<8x128xf32>
    %c0_83 = arith.constant 0 : index
    %c5_84 = arith.constant 5 : index
    %c0_85 = arith.constant 0 : index
    %c0_86 = arith.constant 0 : index
    %93 = vector.load %arg6[%c0_83, %c5_84, %c0_85, %c0_86] : memref<1x8x8x128xf32, #tpu.memory_space<vmem>>, vector<1x1x8x128xf32>
    %94 = vector.shape_cast %93 : vector<1x1x8x128xf32> to vector<8x128xf32>
    %95 = arith.subf %92, %94 : vector<8x128xf32>
    %96 = math.absf %95 : vector<8x128xf32>
    %97 = arith.cmpf olt, %96, %6 : vector<8x128xf32>
    %98 = arith.mulf %96, %96 : vector<8x128xf32>
    %cst_87 = arith.constant 5.000000e-01 : f32
    %99 = vector.broadcast %cst_87 : f32 to vector<8x128xf32>
    %100 = arith.subf %96, %99 : vector<8x128xf32>
    %101 = arith.select %97, %98, %100 : vector<8x128xi1>, vector<8x128xf32>
    %102 = arith.addf %90, %101 : vector<8x128xf32>
    %c0_88 = arith.constant 0 : index
    %c6 = arith.constant 6 : index
    %c0_89 = arith.constant 0 : index
    %c0_90 = arith.constant 0 : index
    %103 = vector.load %arg7[%c0_88, %c6, %c0_89, %c0_90] : memref<1x9x8x128xf32, #tpu.memory_space<vmem>>, vector<1x1x8x128xf32>
    %104 = vector.shape_cast %103 : vector<1x1x8x128xf32> to vector<8x128xf32>
    %c0_91 = arith.constant 0 : index
    %c6_92 = arith.constant 6 : index
    %c0_93 = arith.constant 0 : index
    %c0_94 = arith.constant 0 : index
    %105 = vector.load %arg6[%c0_91, %c6_92, %c0_93, %c0_94] : memref<1x8x8x128xf32, #tpu.memory_space<vmem>>, vector<1x1x8x128xf32>
    %106 = vector.shape_cast %105 : vector<1x1x8x128xf32> to vector<8x128xf32>
    %107 = arith.subf %104, %106 : vector<8x128xf32>
    %108 = math.absf %107 : vector<8x128xf32>
    %109 = arith.cmpf olt, %108, %6 : vector<8x128xf32>
    %110 = arith.mulf %108, %108 : vector<8x128xf32>
    %cst_95 = arith.constant 5.000000e-01 : f32
    %111 = vector.broadcast %cst_95 : f32 to vector<8x128xf32>
    %112 = arith.subf %108, %111 : vector<8x128xf32>
    %113 = arith.select %109, %110, %112 : vector<8x128xi1>, vector<8x128xf32>
    %114 = arith.addf %102, %113 : vector<8x128xf32>
    %c0_96 = arith.constant 0 : index
    %c7 = arith.constant 7 : index
    %c0_97 = arith.constant 0 : index
    %c0_98 = arith.constant 0 : index
    %115 = vector.load %arg7[%c0_96, %c7, %c0_97, %c0_98] : memref<1x9x8x128xf32, #tpu.memory_space<vmem>>, vector<1x1x8x128xf32>
    %116 = vector.shape_cast %115 : vector<1x1x8x128xf32> to vector<8x128xf32>
    %c0_99 = arith.constant 0 : index
    %c7_100 = arith.constant 7 : index
    %c0_101 = arith.constant 0 : index
    %c0_102 = arith.constant 0 : index
    %117 = vector.load %arg6[%c0_99, %c7_100, %c0_101, %c0_102] : memref<1x8x8x128xf32, #tpu.memory_space<vmem>>, vector<1x1x8x128xf32>
    %118 = vector.shape_cast %117 : vector<1x1x8x128xf32> to vector<8x128xf32>
    %119 = arith.subf %116, %118 : vector<8x128xf32>
    %120 = math.absf %119 : vector<8x128xf32>
    %121 = arith.cmpf olt, %120, %6 : vector<8x128xf32>
    %122 = arith.mulf %120, %120 : vector<8x128xf32>
    %cst_103 = arith.constant 5.000000e-01 : f32
    %123 = vector.broadcast %cst_103 : f32 to vector<8x128xf32>
    %124 = arith.subf %120, %123 : vector<8x128xf32>
    %125 = arith.select %121, %122, %124 : vector<8x128xi1>, vector<8x128xf32>
    %126 = arith.addf %114, %125 : vector<8x128xf32>
    %c0_104 = arith.constant 0 : index
    %c8 = arith.constant 8 : index
    %c0_105 = arith.constant 0 : index
    %c0_106 = arith.constant 0 : index
    %127 = vector.load %arg7[%c0_104, %c8, %c0_105, %c0_106] : memref<1x9x8x128xf32, #tpu.memory_space<vmem>>, vector<1x1x8x128xf32>
    %128 = vector.shape_cast %127 : vector<1x1x8x128xf32> to vector<8x128xf32>
    %cst_107 = arith.constant 1.250000e-01 : f32
    %129 = vector.broadcast %cst_107 : f32 to vector<8x128xf32>
    %130 = arith.mulf %128, %129 : vector<8x128xf32>
    %c0_108 = arith.constant 0 : index
    %c0_109 = arith.constant 0 : index
    %c3_110 = arith.constant 3 : index
    %c0_111 = arith.constant 0 : index
    %c0_112 = arith.constant 0 : index
    %131 = vector.load %arg8[%c0_108, %c0_109, %c3_110, %c0_111, %c0_112] : memref<1x1x4x8x128xf32, #tpu.memory_space<vmem>>, vector<1x1x1x8x128xf32>
    %132 = vector.shape_cast %131 : vector<1x1x1x8x128xf32> to vector<8x128xf32>
    %133 = arith.mulf %130, %6 : vector<8x128xf32>
    %134 = arith.mulf %133, %6 : vector<8x128xf32>
    %135 = arith.mulf %126, %134 : vector<8x128xf32>
    %136 = arith.addf %132, %135 : vector<8x128xf32>
    %c0_113 = arith.constant 0 : index
    %c0_114 = arith.constant 0 : index
    %c3_115 = arith.constant 3 : index
    %c0_116 = arith.constant 0 : index
    %c0_117 = arith.constant 0 : index
    %137 = vector.load %arg8[%c0_113, %c0_114, %c3_115, %c0_116, %c0_117] : memref<1x1x4x8x128xf32, #tpu.memory_space<vmem>>, vector<1x1x1x8x128xf32>
    %138 = vector.shape_cast %137 : vector<1x1x1x8x128xf32> to vector<8x128xf32>
    %139 = vector.shape_cast %136 : vector<8x128xf32> to vector<1x1x1x8x128xf32>
    tpu.vector_store %arg8[%c0_113, %c0_114, %c3_115, %c0_116, %c0_117], %139 {strides = array<i32>} : memref<1x1x4x8x128xf32, #tpu.memory_space<vmem>>, vector<1x1x1x8x128xf32>,
    return
  }
  func.func @transform_0(%arg0: i32, %arg1: i32, %arg2: i32) -> (i32, i32, i32) {
    %c1_i32 = arith.constant 1 : i32
    %0 = arith.muli %arg1, %c1_i32 : i32
    %1 = arith.addi %0, %arg2 : i32
    %c0_i32 = arith.constant 0 : i32
    %c0_i32_0 = arith.constant 0 : i32
    return %arg0, %1, %c0_i32 : i32, i32, i32
  }
  func.func @transform_1(%arg0: i32, %arg1: i32, %arg2: i32) -> (i32, i32, i32) {
    %c1_i32 = arith.constant 1 : i32
    %0 = arith.muli %arg1, %c1_i32 : i32
    %1 = arith.addi %0, %arg2 : i32
    %c0_i32 = arith.constant 0 : i32
    %c0_i32_0 = arith.constant 0 : i32
    return %arg0, %1, %c0_i32 : i32, i32, i32
  }
  func.func @transform_2(%arg0: i32, %arg1: i32, %arg2: i32) -> (i32, i32, i32) {
    %c1_i32 = arith.constant 1 : i32
    %0 = arith.muli %arg1, %c1_i32 : i32
    %1 = arith.addi %0, %arg2 : i32
    %c0_i32 = arith.constant 0 : i32
    %c0_i32_0 = arith.constant 0 : i32
    return %arg0, %1, %c0_i32 : i32, i32, i32
  }
  func.func @transform_3(%arg0: i32, %arg1: i32, %arg2: i32) -> (i32, i32, i32, i32) {
    %c1_i32 = arith.constant 1 : i32
    %0 = arith.muli %arg1, %c1_i32 : i32
    %1 = arith.addi %0, %arg2 : i32
    %c0_i32 = arith.constant 0 : i32
    %c0_i32_0 = arith.constant 0 : i32
    %c0_i32_1 = arith.constant 0 : i32
    return %arg0, %c0_i32, %1, %c0_i32_0 : i32, i32, i32, i32
  }
  func.func @transform_4(%arg0: i32, %arg1: i32, %arg2: i32) -> (i32, i32, i32, i32) {
    %c1_i32 = arith.constant 1 : i32
    %0 = arith.muli %arg1, %c1_i32 : i32
    %1 = arith.addi %0, %arg2 : i32
    %c0_i32 = arith.constant 0 : i32
    %c0_i32_0 = arith.constant 0 : i32
    %c0_i32_1 = arith.constant 0 : i32
    return %arg0, %c0_i32, %1, %c0_i32_0 : i32, i32, i32, i32
  }
  func.func @transform_5(%arg0: i32, %arg1: i32, %arg2: i32) -> (i32, i32, i32, i32, i32) {
    %c0_i32 = arith.constant 0 : i32
    %c0_i32_0 = arith.constant 0 : i32
    %c0_i32_1 = arith.constant 0 : i32
    %c0_i32_2 = arith.constant 0 : i32
    return %arg0, %arg1, %c0_i32, %c0_i32_0, %c0_i32_1 : i32, i32, i32, i32, i32
  }
}

</mosaic_0001>

<llo_original>
// kernel: east_loss.1
$region0: #{east_loss.1}
  #allocation0 [shape = 'u32[]', space=smem, size = 0x4, offset = 0x4, fixed_abs, tag = 'smem constant byte address 0x4 - core index']
  #allocation1 [shape = 'u32[144,128]{1,0:T(1,128)}', space=vmem, size = 0x12000, scoped, tag = 'internal scratch']
  %s0 = inlined_call_operand.vmem [shape: f32[2,8,128], index: 0, kind: input, shape index: {}]
  %s1 = inlined_call_operand.vmem [shape: f32[2,8,128], index: 1, kind: input, shape index: {}]
  %s2 = inlined_call_operand.vmem [shape: f32[2,8,128], index: 2, kind: input, shape index: {}]
  %s3 = inlined_call_operand.vmem [shape: f32[2,8,8,128], index: 3, kind: input, shape index: {}]
  %s4 = inlined_call_operand.vmem [shape: f32[2,9,8,128], index: 4, kind: input, shape index: {}]
  %s5 = inlined_call_operand.vmem [shape: f32[2,1,4,8,128], index: 5, kind: output, shape index: {}]
  %s6 = sld [smem:[#allocation0]]
  $region57: #{east_loss.1} parent=0
    _
  %s8 = ssub.s32 1, %s6
  %s9 = scalar_select 0, %s8, %s6
  loop: start=0, step=1, limit=4
  $region2: #{east_loss.1} parent=0 // loop_pre_header
    _
  $region3: #{east_loss.1} parent=0 // loop_header
    %s11 = sphi 0, %s15
    %p12 = scmp.ge.s32.totalorder %s11, 4
    %s18 = sphi 0, %s37
    %s19 = sphi 0, %s33
    %s20 = sphi 0, %s29
    %s21 = sphi 0, %s18
    %s22 = sphi 0, %s19
    %s23 = sphi 0, %s20
    %s24 = sphi 0, %s21
    %s25 = sphi 0, %s22
    %s26 = sphi 0, %s23
    %s44 = sphi 0, %s46
    %s47 = sphi 0, %s44
    %s48 = sphi 0, %s47
    %s64 = sphi 0, %s48
    %s74 = sphi 0, %s76
    %s77 = sphi 0, %s74
    %s78 = sphi 0, %s77
    %s94 = sphi 0, %s78
    %s104 = sphi 0, %s106
    %s107 = sphi 0, %s104
    %s108 = sphi 0, %s107
    %s124 = sphi 0, %s108
    %s134 = sphi 0, %s136
    %s137 = sphi 0, %s134
    %s138 = sphi 0, %s137
    %s154 = sphi 0, %s138
    %s164 = sphi 0, %s166
    %s167 = sphi 0, %s164
    %s168 = sphi 0, %s167
    %s184 = sphi 0, %s168
    %s192 = sphi 0, %s194
    %s195 = sphi 0, %s192
    %s196 = sphi 0, %s195
    %s212 = sphi 0, %s196
  $region4: #{east_loss.1} parent=0 // loop_header_branch
    %14 = sbr.rel (%p12) target = $region8
  $region5: #{east_loss.1} parent=0 // loop_body
    %s16 = ssub.s32 %s11, 1
    %s17 = ssub.s32 %s11, 2
    %s27 = sadd.s32 1, %s20
    %p28 = scmp.ge.s32.totalorder %s27, 1
    %s29 = scalar_select %p28, 0, %s27
    %s30 = sadd.s32 1, %s19
    %s31 = scalar_select %p28, %s30, %s19
    %p32 = scmp.ge.s32.totalorder %s31, 1
    %s33 = scalar_select %p32, 0, %s31
    %s34 = sadd.s32 1, %s18
    %s35 = scalar_select %p32, %s34, %s18
    %p36 = scmp.ge.s32.totalorder %s35, 2
    %s37 = scalar_select %p36, 0, %s35
    %s38 = sadd.s32 %s19, %s20
    %s39 = sadd.s32 %s33, %s29
    %s40 = ssub.s32 %s18, %s37
    %s41 = ssub.s32 %s38, %s39
    %s42 = sor.u32 %s40, %s41
    %p43 = scmp.eq.s32.totalorder %s42, 0
    %s45 = sadd.s32 %s44, 1
    %s46 = scalar_select %p43, %s44, %s45
    %p49 = pneg %p43
    %p50 = scmp.eq.s32.totalorder %s11, 1
    %p51 = por %p49, %p50
    %p52 = scmp.ne.s32.totalorder %s44, %s47
    %p53 = scmp.eq.s32.totalorder %s11, 0
    %p54 = por %p52, %p53
    %p55 = scmp.ne.s32.totalorder %s44, %s47
    %p56 = scmp.eq.s32.totalorder %s16, 1
    %p57 = por %p55, %p56
    %p58 = scmp.ne.s32.totalorder %s47, %s48
    %p59 = scmp.eq.s32.totalorder %s16, 0
    %p60 = por %p58, %p59
    %p61 = scmp.ne.s32.totalorder %s47, %s48
    %p62 = scmp.eq.s32.totalorder %s17, 1
    %p63 = por %p61, %p62
    %p65 = scmp.ne.s32.totalorder %s48, %s64
    %p66 = scmp.eq.s32.totalorder %s17, 0
    %p67 = por %p65, %p66
    %s68 = sadd.s32 %s19, %s20
    %s69 = sadd.s32 %s33, %s29
    %s70 = ssub.s32 %s18, %s37
    %s71 = ssub.s32 %s68, %s69
    %s72 = sor.u32 %s70, %s71
    %p73 = scmp.eq.s32.totalorder %s72, 0
    %s75 = sadd.s32 %s74, 1
    %s76 = scalar_select %p73, %s74, %s75
    %p79 = pneg %p73
    %p80 = scmp.eq.s32.totalorder %s11, 1
    %p81 = por %p79, %p80
    %p82 = scmp.ne.s32.totalorder %s74, %s77
    %p83 = scmp.eq.s32.totalorder %s11, 0
    %p84 = por %p82, %p83
    %p85 = scmp.ne.s32.totalorder %s74, %s77
    %p86 = scmp.eq.s32.totalorder %s16, 1
    %p87 = por %p85, %p86
    %p88 = scmp.ne.s32.totalorder %s77, %s78
    %p89 = scmp.eq.s32.totalorder %s16, 0
    %p90 = por %p88, %p89
    %p91 = scmp.ne.s32.totalorder %s77, %s78
    %p92 = scmp.eq.s32.totalorder %s17, 1
    %p93 = por %p91, %p92
    %p95 = scmp.ne.s32.totalorder %s78, %s94
    %p96 = scmp.eq.s32.totalorder %s17, 0
    %p97 = por %p95, %p96
    %s98 = sadd.s32 %s19, %s20
    %s99 = sadd.s32 %s33, %s29
    %s100 = ssub.s32 %s18, %s37
    %s101 = ssub.s32 %s98, %s99
    %s102 = sor.u32 %s100, %s101
    %p103 = scmp.eq.s32.totalorder %s102, 0
    %s105 = sadd.s32 %s104, 1
    %s106 = scalar_select %p103, %s104, %s105
    %p109 = pneg %p103
    %p110 = scmp.eq.s32.totalorder %s11, 1
    %p111 = por %p109, %p110
    %p112 = scmp.ne.s32.totalorder %s104, %s107
    %p113 = scmp.eq.s32.totalorder %s11, 0
    %p114 = por %p112, %p113
    %p115 = scmp.ne.s32.totalorder %s104, %s107
    %p116 = scmp.eq.s32.totalorder %s16, 1
    %p117 = por %p115, %p116
    %p118 = scmp.ne.s32.totalorder %s107, %s108
    %p119 = scmp.eq.s32.totalorder %s16, 0
    %p120 = por %p118, %p119
    %p121 = scmp.ne.s32.totalorder %s107, %s108
    %p122 = scmp.eq.s32.totalorder %s17, 1
    %p123 = por %p121, %p122
    %p125 = scmp.ne.s32.totalorder %s108, %s124
    %p126 = scmp.eq.s32.totalorder %s17, 0
    %p127 = por %p125, %p126
    %s128 = sadd.s32 %s19, %s20
    %s129 = sadd.s32 %s33, %s29
    %s130 = ssub.s32 %s18, %s37
    %s131 = ssub.s32 %s128, %s129
    %s132 = sor.u32 %s130, %s131
    %p133 = scmp.eq.s32.totalorder %s132, 0
    %s135 = sadd.s32 %s134, 1
    %s136 = scalar_select %p133, %s134, %s135
    %p139 = pneg %p133
    %p140 = scmp.eq.s32.totalorder %s11, 1
    %p141 = por %p139, %p140
    %p142 = scmp.ne.s32.totalorder %s134, %s137
    %p143 = scmp.eq.s32.totalorder %s11, 0
    %p144 = por %p142, %p143
    %p145 = scmp.ne.s32.totalorder %s134, %s137
    %p146 = scmp.eq.s32.totalorder %s16, 1
    %p147 = por %p145, %p146
    %p148 = scmp.ne.s32.totalorder %s137, %s138
    %p149 = scmp.eq.s32.totalorder %s16, 0
    %p150 = por %p148, %p149
    %p151 = scmp.ne.s32.totalorder %s137, %s138
    %p152 = scmp.eq.s32.totalorder %s17, 1
    %p153 = por %p151, %p152
    %p155 = scmp.ne.s32.totalorder %s138, %s154
    %p156 = scmp.eq.s32.totalorder %s17, 0
    %p157 = por %p155, %p156
    %s158 = sadd.s32 %s19, %s20
    %s159 = sadd.s32 %s33, %s29
    %s160 = ssub.s32 %s18, %s37
    %s161 = ssub.s32 %s158, %s159
    %s162 = sor.u32 %s160, %s161
    %p163 = scmp.eq.s32.totalorder %s162, 0
    %s165 = sadd.s32 %s164, 1
    %s166 = scalar_select %p163, %s164, %s165
    %p169 = pneg %p163
    %p170 = scmp.eq.s32.totalorder %s11, 1
    %p171 = por %p169, %p170
    %p172 = scmp.ne.s32.totalorder %s164, %s167
    %p173 = scmp.eq.s32.totalorder %s11, 0
    %p174 = por %p172, %p173
    %p175 = scmp.ne.s32.totalorder %s164, %s167
    %p176 = scmp.eq.s32.totalorder %s16, 1
    %p177 = por %p175, %p176
    %p178 = scmp.ne.s32.totalorder %s167, %s168
    %p179 = scmp.eq.s32.totalorder %s16, 0
    %p180 = por %p178, %p179
    %p181 = scmp.ne.s32.totalorder %s167, %s168
    %p182 = scmp.eq.s32.totalorder %s17, 1
    %p183 = por %p181, %p182
    %p185 = scmp.ne.s32.totalorder %s168, %s184
    %p186 = scmp.eq.s32.totalorder %s17, 0
    %p187 = por %p185, %p186
    %s188 = ssub.s32 %s18, %s37
    %s189 = ssub.s32 %s19, %s33
    %s190 = sor.u32 %s188, %s189
    %p191 = scmp.eq.s32.totalorder %s190, 0
    %s193 = sadd.s32 %s192, 1
    %s194 = scalar_select %p191, %s192, %s193
    %p197 = pneg %p191
    %p198 = scmp.eq.s32.totalorder %s11, 1
    %p199 = por %p197, %p198
    %p200 = scmp.ne.s32.totalorder %s192, %s195
    %p201 = scmp.eq.s32.totalorder %s11, 0
    %p202 = por %p200, %p201
    %p203 = scmp.ne.s32.totalorder %s192, %s195
    %p204 = scmp.eq.s32.totalorder %s16, 1
    %p205 = por %p203, %p204
    %p206 = scmp.ne.s32.totalorder %s195, %s196
    %p207 = scmp.eq.s32.totalorder %s16, 0
    %p208 = por %p206, %p207
    %p209 = scmp.ne.s32.totalorder %s195, %s196
    %p210 = scmp.eq.s32.totalorder %s17, 1
    %p211 = por %p209, %p210
    %p213 = scmp.ne.s32.totalorder %s196, %s212
    %p214 = scmp.eq.s32.totalorder %s17, 0
    %p215 = por %p213, %p214
    %p216 = scmp.le.s32.totalorder 1, %s11
    %p217 = scmp.lt.s32.totalorder %s11, 3
    %p218 = pnand %p216, %p217
    %p219 = pneg %p218
    // Predicated region
    $region9: #{east_loss.1} parent=5 // pred_check
      _
    $region10: #{east_loss.1} parent=5 // pred_check_branch
      %221 = sbr.rel (%p218) target = $region12
    $region11: #{east_loss.1} parent=5 // pred_region
      %s222 = ssub.s32 %s11, 1
    $region12: #{east_loss.1} parent=5 // pred_fallthru
      _
    %p223 = scmp.lt.s32.totalorder %s11, 2
    // Predicated region
    $region13: #{east_loss.1} parent=5 // pred_check
      %p224 = pneg %p223
    $region14: #{east_loss.1} parent=5 // pred_check_branch
      %226 = sbr.rel (%p224) target = $region16
    $region15: #{east_loss.1} parent=5 // pred_region
      // Predicated region
      $region17: #{east_loss.1} parent=15 // pred_check
        %p227 = pneg %p54
      $region18: #{east_loss.1} parent=15 // pred_check_branch
        %229 = sbr.rel (%p227) target = $region20
      $region19: #{east_loss.1} parent=15 // pred_region
        %s230 = sadd.s32 %s19, %s20
        %p231 = scmp.lt.s32.totalorder %s18, 1
        %s232 = scalar_select %p231, %s18, 1
        %p233 = scmp.lt.s32.totalorder %s230, 0
        %s234 = scalar_select %p233, %s230, 0
        %s235 = sadd.s32 %s234, %s232
        %s236 = smul.addr %s235, 8
        %s237 = scalar_lea.vmem %s0, %s236
        %s238 = sadd.s32 %s19, %s20
      $region20: #{east_loss.1} parent=15 // pred_fallthru
        _
      // Predicated region
      $region21: #{east_loss.1} parent=15 // pred_check
        %p239 = pneg %p84
      $region22: #{east_loss.1} parent=15 // pred_check_branch
        %241 = sbr.rel (%p239) target = $region24
      $region23: #{east_loss.1} parent=15 // pred_region
        %s242 = sadd.s32 %s19, %s20
        %p243 = scmp.lt.s32.totalorder %s18, 1
        %s244 = scalar_select %p243, %s18, 1
        %p245 = scmp.lt.s32.totalorder %s242, 0
        %s246 = scalar_select %p245, %s242, 0
        %s247 = sadd.s32 %s246, %s244
        %s248 = smul.addr %s247, 8
        %s249 = scalar_lea.vmem %s1, %s248
        %s250 = sadd.s32 %s19, %s20
      $region24: #{east_loss.1} parent=15 // pred_fallthru
        _
      // Predicated region
      $region25: #{east_loss.1} parent=15 // pred_check
        %p251 = pneg %p114
      $region26: #{east_loss.1} parent=15 // pred_check_branch
        %253 = sbr.rel (%p251) target = $region28
      $region27: #{east_loss.1} parent=15 // pred_region
        %s254 = sadd.s32 %s19, %s20
        %p255 = scmp.lt.s32.totalorder %s18, 1
        %s256 = scalar_select %p255, %s18, 1
        %p257 = scmp.lt.s32.totalorder %s254, 0
        %s258 = scalar_select %p257, %s254, 0
        %s259 = sadd.s32 %s258, %s256
        %s260 = smul.addr %s259, 8
        %s261 = scalar_lea.vmem %s2, %s260
        %s262 = sadd.s32 %s19, %s20
      $region28: #{east_loss.1} parent=15 // pred_fallthru
        _
      // Predicated region
      $region29: #{east_loss.1} parent=15 // pred_check
        %p263 = pneg %p144
      $region30: #{east_loss.1} parent=15 // pred_check_branch
        %265 = sbr.rel (%p263) target = $region32
      $region31: #{east_loss.1} parent=15 // pred_region
        %s266 = sadd.s32 %s19, %s20
        %p267 = scmp.lt.s32.totalorder %s18, 1
        %s268 = scalar_select %p267, %s18, 1
        %p269 = scmp.lt.s32.totalorder %s266, 0
        %s270 = scalar_select %p269, %s266, 0
        %s271 = smul.addr %s268, 8
        %s272 = sadd.s32 %s270, %s271
        %s273 = smul.addr %s272, 8
        %s274 = scalar_lea.vmem %s3, %s273
        %s275 = sadd.s32 %s19, %s20
      $region32: #{east_loss.1} parent=15 // pred_fallthru
        _
      // Predicated region
      $region33: #{east_loss.1} parent=15 // pred_check
        %p276 = pneg %p174
      $region34: #{east_loss.1} parent=15 // pred_check_branch
        %278 = sbr.rel (%p276) target = $region36
      $region35: #{east_loss.1} parent=15 // pred_region
        %s279 = sadd.s32 %s19, %s20
        %p280 = scmp.lt.s32.totalorder %s18, 1
        %s281 = scalar_select %p280, %s18, 1
        %p282 = scmp.lt.s32.totalorder %s279, 0
        %s283 = scalar_select %p282, %s279, 0
        %s284 = smul.addr %s281, 9
        %s285 = sadd.s32 %s283, %s284
        %s286 = smul.addr %s285, 8
        %s287 = scalar_lea.vmem %s4, %s286
        %s288 = sadd.s32 %s19, %s20
      $region36: #{east_loss.1} parent=15 // pred_fallthru
        _
    $region16: #{east_loss.1} parent=5 // pred_fallthru
      _
    %p289 = scmp.le.s32.totalorder 1, %s11
    %p290 = scmp.lt.s32.totalorder %s11, 3
    %p291 = pnand %p289, %p290
    %p292 = pneg %p291
    // Predicated region
    $region37: #{east_loss.1} parent=5 // pred_check
      _
    $region38: #{east_loss.1} parent=5 // pred_check_branch
      %294 = sbr.rel (%p291) target = $region40
    $region39: #{east_loss.1} parent=5 // pred_region
      %s295 = ssub.s32 %s11, 1
      %s296 = sadd.s32 %s22, %s23
      %p297 = scmp.lt.s32.totalorder %s21, 1
      %s298 = scalar_select %p297, %s21, 1
      %p299 = scmp.lt.s32.totalorder %s296, 0
      %s300 = scalar_select %p299, %s296, 0
      %s301 = sadd.s32 %s300, %s298
      %s302 = smul.addr %s301, 8
      %s303 = scalar_lea.vmem %s0, %s302
      %p304 = pneg %p60
      %p305 = pneg %p57
      %s306 = sadd.s32 %s22, %s23
      %p307 = scmp.lt.s32.totalorder %s21, 1
      %s308 = scalar_select %p307, %s21, 1
      %p309 = scmp.lt.s32.totalorder %s306, 0
      %s310 = scalar_select %p309, %s306, 0
      %s311 = sadd.s32 %s310, %s308
      %s312 = smul.addr %s311, 8
      %s313 = scalar_lea.vmem %s1, %s312
      %p314 = pneg %p90
      %p315 = pneg %p87
      %s316 = sadd.s32 %s22, %s23
      %p317 = scmp.lt.s32.totalorder %s21, 1
      %s318 = scalar_select %p317, %s21, 1
      %p319 = scmp.lt.s32.totalorder %s316, 0
      %s320 = scalar_select %p319, %s316, 0
      %s321 = sadd.s32 %s320, %s318
      %s322 = smul.addr %s321, 8
      %s323 = scalar_lea.vmem %s2, %s322
      %p324 = pneg %p120
      %p325 = pneg %p117
      %s326 = sadd.s32 %s22, %s23
      %p327 = scmp.lt.s32.totalorder %s21, 1
      %s328 = scalar_select %p327, %s21, 1
      %p329 = scmp.lt.s32.totalorder %s326, 0
      %s330 = scalar_select %p329, %s326, 0
      %s331 = smul.addr %s328, 8
      %s332 = sadd.s32 %s330, %s331
      %s333 = smul.addr %s332, 8
      %s334 = scalar_lea.vmem %s3, %s333
      %p335 = pneg %p150
      %p336 = pneg %p147
      %s337 = sadd.s32 %s22, %s23
      %p338 = scmp.lt.s32.totalorder %s21, 1
      %s339 = scalar_select %p338, %s21, 1
      %p340 = scmp.lt.s32.totalorder %s337, 0
      %s341 = scalar_select %p340, %s337, 0
      %s342 = smul.addr %s339, 9
      %s343 = sadd.s32 %s341, %s342
      %s344 = smul.addr %s343, 8
      %s345 = scalar_lea.vmem %s4, %s344
      %p346 = pneg %p180
      %p347 = pneg %p177
      %p348 = pneg %p208
      %p349 = pneg %p205
      %p350 = scmp.lt.s32.totalorder %s21, 1
      %s351 = scalar_select %p350, %s21, 1
      %p352 = scmp.lt.s32.totalorder %s22, 0
      %s353 = scalar_select %p352, %s22, 0
      %s354 = smul.addr %s353, 4
      %s355 = smul.addr %s351, 4
      %s356 = sadd.s32 %s354, %s355
      %s357 = smul.addr %s356, 8
      %s358 = scalar_lea.vmem %s5, %s357
      %s359 = sadd.s32 %s22, %s23
      %p360 = scmp.lt.s32.totalorder %s21, 1
      %s361 = scalar_select %p360, %s21, 1
      %p362 = scmp.lt.s32.totalorder %s359, 0
      %s363 = scalar_select %p362, %s359, 0
      %s364 = sadd.s32 %s363, %s361
      %s365 = smul.addr %s364, 8
      %s366 = scalar_lea.vmem %s0, %s365
      %s367 = sadd.s32 %s22, %s23
      %s368 = sadd.s32 %s22, %s23
      %p369 = scmp.lt.s32.totalorder %s21, 1
      %s370 = scalar_select %p369, %s21, 1
      %p371 = scmp.lt.s32.totalorder %s368, 0
      %s372 = scalar_select %p371, %s368, 0
      %s373 = sadd.s32 %s372, %s370
      %s374 = smul.addr %s373, 8
      %s375 = scalar_lea.vmem %s1, %s374
      %s376 = sadd.s32 %s22, %s23
      %s377 = sadd.s32 %s22, %s23
      %p378 = scmp.lt.s32.totalorder %s21, 1
      %s379 = scalar_select %p378, %s21, 1
      %p380 = scmp.lt.s32.totalorder %s377, 0
      %s381 = scalar_select %p380, %s377, 0
      %s382 = sadd.s32 %s381, %s379
      %s383 = smul.addr %s382, 8
      %s384 = scalar_lea.vmem %s2, %s383
      %s385 = sadd.s32 %s22, %s23
      %s386 = sadd.s32 %s22, %s23
      %p387 = scmp.lt.s32.totalorder %s21, 1
      %s388 = scalar_select %p387, %s21, 1
      %p389 = scmp.lt.s32.totalorder %s386, 0
      %s390 = scalar_select %p389, %s386, 0
      %s391 = smul.addr %s388, 8
      %s392 = sadd.s32 %s390, %s391
      %s393 = smul.addr %s392, 8
      %s394 = scalar_lea.vmem %s3, %s393
      %s395 = sadd.s32 %s22, %s23
      %s396 = sadd.s32 %s22, %s23
      %p397 = scmp.lt.s32.totalorder %s21, 1
      %s398 = scalar_select %p397, %s21, 1
      %p399 = scmp.lt.s32.totalorder %s396, 0
      %s400 = scalar_select %p399, %s396, 0
      %s401 = smul.addr %s398, 9
      %s402 = sadd.s32 %s400, %s401
      %s403 = smul.addr %s402, 8
      %s404 = scalar_lea.vmem %s4, %s403
      %s405 = sadd.s32 %s22, %s23
      %p406 = scmp.lt.s32.totalorder %s21, 1
      %s407 = scalar_select %p406, %s21, 1
      %p408 = scmp.lt.s32.totalorder %s22, 0
      %s409 = scalar_select %p408, %s22, 0
      %s410 = smul.addr %s409, 4
      %s411 = smul.addr %s407, 4
      %s412 = sadd.s32 %s410, %s411
      %s413 = smul.addr %s412, 8
      %s414 = scalar_lea.vmem %s5, %s413
      %p415 = scmp.eq.s32.totalorder %s23, 0
      // Predicated region
      $region41: #{east_loss.1} parent=39 // pred_check
        %p416 = pneg %p415
      $region42: #{east_loss.1} parent=39 // pred_check_branch
        %418 = sbr.rel (%p416) target = $region44
      $region43: #{east_loss.1} parent=39 // pred_region
        %419 = vst [vmem:[%s414] sm:$0xff] 0.0
        %420 = vst [vmem:[%s414 + $0x8] sm:$0xff] 0.0
        %421 = vst [vmem:[%s414 + $0x10] sm:$0xff] 0.0
        %422 = vst [vmem:[%s414 + $0x18] sm:$0xff] 0.0
      $region44: #{east_loss.1} parent=39 // pred_fallthru
        _
      %v423 = vld [vmem:[%s366] sm:$0xff]
      %v424 = vld [vmem:[%s375] sm:$0xff]
      %v425 = vld [vmem:[%s384] sm:$0xff]
      %v426 = vmul.f32 %v424, %v425
      %v427 = vld [vmem:[%s414] sm:$0xff]
      %v428 = vmul.f32 %v423, %v426
      %v429 = vadd.f32 %v427, %v428
      %430 = vst [vmem:[%s414] sm:$0xff] %v429
      %s431 = scalar_lea.vmem %s414, 8
      %v432 = vld [vmem:[%s431] sm:$0xff]
      %v433 = vmul.f32 %v423, %v425
      %v434 = vadd.f32 %v432, %v433
      %435 = vst [vmem:[%s431] sm:$0xff] %v434
      %s436 = scalar_lea.vmem %s414, 16
      %v437 = vld [vmem:[%s436] sm:$0xff]
      %v438 = vadd.f32 %v437, %v426
      %439 = vst [vmem:[%s436] sm:$0xff] %v438
      %v440 = vld [vmem:[%s404] sm:$0xff]
      %v441 = vld [vmem:[%s394] sm:$0xff]
      %v442 = vsub.f32 %v440, %v441
      %v443 = vand.u32 2147483647, %v442
      %vm444 = vcmp.lt.f32.partialorder %v443, %v424
      %v445 = vmul.f32 %v443, %v443
      %v446 = vsub.f32 %v443, 0.5
      %v447 = vsel %vm444, %v445, %v446
      %v448 = vadd.f32 %v447, 0.0
      %s449 = scalar_lea.vmem %s404, 8
      %v450 = vld [vmem:[%s449] sm:$0xff]
      %s451 = scalar_lea.vmem %s394, 8
      %v452 = vld [vmem:[%s451] sm:$0xff]
      %v453 = vsub.f32 %v450, %v452
      %v454 = vand.u32 2147483647, %v453
      %vm455 = vcmp.lt.f32.partialorder %v454, %v424
      %v456 = vmul.f32 %v454, %v454
      %v457 = vsub.f32 %v454, 0.5
      %v458 = vsel %vm455, %v456, %v457
      %v459 = vadd.f32 %v448, %v458
      %s460 = scalar_lea.vmem %s404, 16
      %v461 = vld [vmem:[%s460] sm:$0xff]
      %s462 = scalar_lea.vmem %s394, 16
      %v463 = vld [vmem:[%s462] sm:$0xff]
      %v464 = vsub.f32 %v461, %v463
      %v465 = vand.u32 2147483647, %v464
      %vm466 = vcmp.lt.f32.partialorder %v465, %v424
      %v467 = vmul.f32 %v465, %v465
      %v468 = vsub.f32 %v465, 0.5
      %v469 = vsel %vm466, %v467, %v468
      %v470 = vadd.f32 %v459, %v469
      %s471 = scalar_lea.vmem %s404, 24
      %v472 = vld [vmem:[%s471] sm:$0xff]
      %s473 = scalar_lea.vmem %s394, 24
      %v474 = vld [vmem:[%s473] sm:$0xff]
      %v475 = vsub.f32 %v472, %v474
      %v476 = vand.u32 2147483647, %v475
      %vm477 = vcmp.lt.f32.partialorder %v476, %v424
      %v478 = vmul.f32 %v476, %v476
      %v479 = vsub.f32 %v476, 0.5
      %v480 = vsel %vm477, %v478, %v479
      %v481 = vadd.f32 %v470, %v480
      %s482 = scalar_lea.vmem %s404, 32
      %v483 = vld [vmem:[%s482] sm:$0xff]
      %s484 = scalar_lea.vmem %s394, 32
      %v485 = vld [vmem:[%s484] sm:$0xff]
      %v486 = vsub.f32 %v483, %v485
      %v487 = vand.u32 2147483647, %v486
      %vm488 = vcmp.lt.f32.partialorder %v487, %v424
      %v489 = vmul.f32 %v487, %v487
      %v490 = vsub.f32 %v487, 0.5
      %v491 = vsel %vm488, %v489, %v490
      %v492 = vadd.f32 %v481, %v491
      %s493 = scalar_lea.vmem %s404, 40
      %v494 = vld [vmem:[%s493] sm:$0xff]
      %s495 = scalar_lea.vmem %s394, 40
      %v496 = vld [vmem:[%s495] sm:$0xff]
      %v497 = vsub.f32 %v494, %v496
      %v498 = vand.u32 2147483647, %v497
      %vm499 = vcmp.lt.f32.partialorder %v498, %v424
      %v500 = vmul.f32 %v498, %v498
      %v501 = vsub.f32 %v498, 0.5
      %v502 = vsel %vm499, %v500, %v501
      %v503 = vadd.f32 %v492, %v502
      %s504 = scalar_lea.vmem %s404, 48
      %v505 = vld [vmem:[%s504] sm:$0xff]
      %s506 = scalar_lea.vmem %s394, 48
      %v507 = vld [vmem:[%s506] sm:$0xff]
      %v508 = vsub.f32 %v505, %v507
      %v509 = vand.u32 2147483647, %v508
      %vm510 = vcmp.lt.f32.partialorder %v509, %v424
      %v511 = vmul.f32 %v509, %v509
      %v512 = vsub.f32 %v509, 0.5
      %v513 = vsel %vm510, %v511, %v512
      %v514 = vadd.f32 %v503, %v513
      %s515 = scalar_lea.vmem %s404, 56
      %v516 = vld [vmem:[%s515] sm:$0xff]
      %s517 = scalar_lea.vmem %s394, 56
      %v518 = vld [vmem:[%s517] sm:$0xff]
      %v519 = vsub.f32 %v516, %v518
      %v520 = vand.u32 2147483647, %v519
      %vm521 = vcmp.lt.f32.partialorder %v520, %v424
      %v522 = vmul.f32 %v520, %v520
      %v523 = vsub.f32 %v520, 0.5
      %v524 = vsel %vm521, %v522, %v523
      %v525 = vadd.f32 %v514, %v524
      %s526 = scalar_lea.vmem %s404, 64
      %v527 = vld [vmem:[%s526] sm:$0xff]
      %v528 = vmul.f32 %v527, 0.125
      %s529 = scalar_lea.vmem %s414, 24
      %v530 = vld [vmem:[%s529] sm:$0xff]
      %v531 = vmul.f32 %v528, %v424
      %v532 = vmul.f32 %v531, %v424
      %v533 = vmul.f32 %v525, %v532
      %v534 = vadd.f32 %v530, %v533
      %535 = vst [vmem:[%s529] sm:$0xff] %v534
      %p536 = scmp.lt.s32.totalorder %s21, 1
      %s537 = scalar_select %p536, %s21, 1
      %p538 = scmp.lt.s32.totalorder %s22, 0
      %s539 = scalar_select %p538, %s22, 0
      %s540 = smul.addr %s539, 4
      %s541 = smul.addr %s537, 4
      %s542 = sadd.s32 %s540, %s541
      %s543 = smul.addr %s542, 8
      %s544 = scalar_lea.vmem %s5, %s543
      // Predicated region
      $region45: #{east_loss.1} parent=39 // pred_check
        %p545 = pneg %p205
      $region46: #{east_loss.1} parent=39 // pred_check_branch
        %547 = sbr.rel (%p545) target = $region48
      $region47: #{east_loss.1} parent=39 // pred_region
        _
      $region48: #{east_loss.1} parent=39 // pred_fallthru
        _
    $region40: #{east_loss.1} parent=5 // pred_fallthru
      _
    %p548 = scmp.le.s32.totalorder 2, %s11
    // Predicated region
    $region49: #{east_loss.1} parent=5 // pred_check
      %p549 = pneg %p548
    $region50: #{east_loss.1} parent=5 // pred_check_branch
      %551 = sbr.rel (%p549) target = $region52
    $region51: #{east_loss.1} parent=5 // pred_region
      %s552 = ssub.s32 %s11, 2
      // Predicated region
      $region53: #{east_loss.1} parent=51 // pred_check
        %p553 = pneg %p211
      $region54: #{east_loss.1} parent=51 // pred_check_branch
        %555 = sbr.rel (%p553) target = $region56
      $region55: #{east_loss.1} parent=51 // pred_region
        %p556 = scmp.lt.s32.totalorder %s24, 1
        %s557 = scalar_select %p556, %s24, 1
        %p558 = scmp.lt.s32.totalorder %s25, 0
        %s559 = scalar_select %p558, %s25, 0
        %s560 = smul.addr %s559, 4
        %s561 = smul.addr %s557, 4
        %s562 = sadd.s32 %s560, %s561
        %s563 = smul.addr %s562, 8
        %s564 = scalar_lea.vmem %s5, %s563
      $region56: #{east_loss.1} parent=51 // pred_fallthru
        _
    $region52: #{east_loss.1} parent=5 // pred_fallthru
      _
  $region6: #{east_loss.1} parent=0 // loop_footer
    %s15 = sadd.s32 1, %s11
  $region7: #{east_loss.1} parent=0 // loop_footer_branch
    %10 = sbr.rel target = $region3
  $region8: #{east_loss.1} parent=0 // loop_exit
    _

</llo_original>
